<compile_context>
chip_gen: v7x
topology: tpu7x:2x2x1
jax: 0.10.0
libtpu: 0.0.40
codegen_flags: <defaults>
</compile_context>

<pallas_src>
import functools

import jax
import jax.numpy as jnp
from jax import lax
from jax.experimental import pallas as pl
from jax.experimental.pallas import tpu as pltpu

LANES = 128  # lane width of the packed weight slab and of the packed output


def _slab_offsets(hidden_size):
    """Sublane offsets (multiples of 8) of each parameter in the packed slab."""
    H = hidden_size
    assert H % 8 == 0, "hidden_size must be a multiple of 8"
    assert 4 * H <= LANES, "4*hidden_size must fit in 128 lanes"
    return {
        "w_lstm": 0,            # (2H, 4H)  [W_ih; W_hh], gate order i,f,g,o
        "w_heads": 2 * H,       # (H, 128)  5 heads packed at lanes [0, sum(head_sizes))
        "w_attn": 3 * H,        # one row, lanes [0, H)
        "b_lstm": 3 * H + 8,    # one row, lanes [0, 4H)   b_ih + b_hh
        "b_heads": 3 * H + 16,  # one row, lanes [0, 128)
        "rows": 3 * H + 24,
    }


def _attn_decoder_kernel(hidden_ref, cell_ref, enc_ref, w_ref, out_ref, *,
                         head_sizes, hidden_size, seq_len):
    f32 = jnp.float32
    H = hidden_size
    S = seq_len
    SH = S * H
    P = out_ref.shape[-1]                       # 128
    TB = hidden_ref.shape[0]
    n_heads = sum(head_sizes)
    offs = _slab_offsets(H)

    hidden = hidden_ref[...]                    # (TB, H)
    cell = cell_ref[...]                        # (TB, H)
    enc = enc_ref[...]                          # (TB, S*H), [b, s*H + h] = enc[b, s, h]

    # ---- packed weight slab: static slices, sublane starts multiples of 8 ----
    w_lstm = w_ref[offs["w_lstm"]:offs["w_lstm"] + 2 * H, :4 * H]      # (2H, 4H)
    w_heads = w_ref[offs["w_heads"]:offs["w_heads"] + H, :]            # (H, 128)
    w_attn = w_ref[offs["w_attn"]:offs["w_attn"] + 1, :H]              # (1, H)
    b_lstm = w_ref[offs["b_lstm"]:offs["b_lstm"] + 1, :4 * H]          # (1, 4H)
    b_heads = w_ref[offs["b_heads"]:offs["b_heads"] + 1, :]            # (1, 128)

    # ---- small 0/1 structural matrices (iota-built, data-independent) --------
    ident = (lax.broadcasted_iota(jnp.int32, (H, H), 0)
             == lax.broadcasted_iota(jnp.int32, (H, H), 1)).astype(f32)
    gather_mat = jnp.concatenate([ident] * S, axis=0)                  # (SH, H)
    j_row = lax.broadcasted_iota(jnp.int32, (SH, S), 0)
    s_col = lax.broadcasted_iota(jnp.int32, (SH, S), 1)
    d = j_row - s_col * H
    sum_mat = jnp.logical_and(d >= 0, d < H).astype(f32)               # (SH, S)
    s_row = lax.broadcasted_iota(jnp.int32, (S, SH), 0)
    j_col = lax.broadcasted_iota(jnp.int32, (S, SH), 1)
    d2 = j_col - s_row * H
    expand_mat = jnp.logical_and(d2 >= 0, d2 < H).astype(f32)          # (S, SH)

    # ---- attention: lane-dense over S*H lanes ---------------------------------
    hidden_t = jnp.concatenate([hidden] * S, axis=-1)                  # (TB, SH) exact tile
    w_attn_t = jnp.concatenate([w_attn] * S, axis=-1)                  # (1, SH)  exact tile
    align = jnp.tanh(hidden_t + enc)                                   # one dense EUP pass
    scores = jnp.dot(align * w_attn_t, sum_mat,
                     preferred_element_type=f32)                       # (TB, S) via MXU
    # attn bias is constant over S -> softmax-invariant, dropped.
    m = jnp.max(scores, axis=-1, keepdims=True)
    e = jnp.exp(scores - m)
    attn_w = e * pl.reciprocal(jnp.sum(e, axis=-1, keepdims=True))     # exact recip
    attn_lanes = jnp.dot(attn_w, expand_mat, preferred_element_type=f32)   # (TB, SH)
    attn_applied = jnp.dot(attn_lanes * enc, gather_mat,
                           preferred_element_type=f32)                 # (TB, H)

    # ---- single-step LSTM: one fused matmul, gate order i,f,g,o ---------------
    x_cat = jnp.concatenate([attn_applied, hidden], axis=-1)           # (TB, 2H)
    gates = jnp.dot(x_cat, w_lstm, preferred_element_type=f32) + b_lstm  # (TB, 4H)
    sig = jax.nn.sigmoid(gates)                                        # full-width EUP
    th = jnp.tanh(gates)
    i_g = sig[:, 0 * H:1 * H]
    f_g = sig[:, 1 * H:2 * H]
    g_g = th[:, 2 * H:3 * H]
    o_g = sig[:, 3 * H:4 * H]
    c_new = f_g * cell + i_g * g_g
    h_new = o_g * jnp.tanh(c_new)

    # ---- 5 output heads: one padded matmul + masked segmented log_softmax -----
    logits = jnp.dot(h_new, w_heads, preferred_element_type=f32) + b_heads   # (TB, 128)
    lane = lax.broadcasted_iota(jnp.int32, (1, P), 1)
    neg_inf = jnp.asarray(-jnp.inf, f32)
    seg_masks = []
    per_lane_max = jnp.zeros_like(logits)
    off = 0
    for n in head_sizes:
        in_seg = jnp.logical_and(lane >= off, lane < off + n)          # (1, P)
        seg_masks.append(in_seg)
        mx = jnp.max(jnp.where(in_seg, logits, neg_inf), axis=-1, keepdims=True)
        per_lane_max = jnp.where(in_seg, mx, per_lane_max)
        off += n
    z = logits - per_lane_max
    ez = jnp.exp(z)                                                    # ONE full-width exp
    per_lane_lse = jnp.zeros_like(logits)
    for in_seg in seg_masks:
        s_k = jnp.sum(jnp.where(in_seg, ez, 0.0), axis=-1, keepdims=True)
        per_lane_lse = jnp.where(in_seg, jnp.log(s_k), per_lane_lse)
    head_lp = z - per_lane_lse                                         # valid on head lanes

    # ---- ONE lane-dense 128-lane output slab ----------------------------------
    pieces = [head_lp[:, :n_heads], h_new, c_new, attn_w]
    n_used = n_heads + 2 * H + S
    if P > n_used:
        pieces.append(jnp.zeros((TB, P - n_used), f32))
    out_ref[...] = jnp.concatenate(pieces, axis=-1)


def pack_params(raw, head_sizes, hidden_size):
    """Pack every parameter into ONE (3H+24, 128) f32 slab (single input DMA)."""
    H = hidden_size
    offs = _slab_offsets(H)
    assert sum(head_sizes) <= LANES
    slab = jnp.zeros((offs["rows"], LANES), jnp.float32)
    slab = slab.at[offs["w_lstm"]:offs["w_lstm"] + 2 * H, :4 * H].set(
        jnp.concatenate([raw["w_ih"], raw["w_hh"]], axis=0))
    w_heads = jnp.zeros((H, LANES), jnp.float32)
    b_heads = jnp.zeros((LANES,), jnp.float32)
    col = 0
    for w_k, b_k, n in zip(raw["w_out"], raw["b_out"], head_sizes):
        w_heads = w_heads.at[:, col:col + n].set(w_k)
        b_heads = b_heads.at[col:col + n].set(b_k)
        col += n
    slab = slab.at[offs["w_heads"]:offs["w_heads"] + H, :].set(w_heads)
    slab = slab.at[offs["w_attn"], :H].set(raw["w_attn"][0])
    slab = slab.at[offs["b_lstm"], :4 * H].set(raw["b_ih"] + raw["b_hh"])
    slab = slab.at[offs["b_heads"], :].set(b_heads)
    return {"w_slab": slab}


@functools.partial(jax.jit, static_argnames=("head_sizes",))
def attn_decoder_forward(hidden, cell_state, encoder_outputs, params, head_sizes):
    """hidden: (B,1,H), cell_state: (1,B,H), encoder_outputs: (B,S,H)."""
    B, S, H = encoder_outputs.shape
    n_heads = sum(head_sizes)
    assert n_heads + 2 * H + S <= LANES, "packed output does not fit in 128 lanes"
    hidden2d = hidden.reshape(B, H)
    cell2d = cell_state.reshape(B, H)
    enc_flat = encoder_outputs.reshape(B, S * H)   # free reshape -> lane-dense layout

    # Batch tiling: single block for small B; 256-row blocks otherwise (fills
    # the 256-row MXU on v6e/v7x, and >=2 blocks let v7x shard across both
    # TensorCores).  Non-multiple batches are zero-padded (never a whole-batch
    # block), keeping per-block VMEM ~1 MiB on every generation.
    if B <= 256:
        tb = B
    elif B % 256 == 0:
        tb = 256
    elif B % 128 == 0:
        tb = 128
    else:
        tb = 256
    Bp = int(pl.cdiv(B, tb)) * tb
    if Bp != B:
        pad = Bp - B
        hidden2d = jnp.pad(hidden2d, ((0, pad), (0, 0)))
        cell2d = jnp.pad(cell2d, ((0, pad), (0, 0)))
        enc_flat = jnp.pad(enc_flat, ((0, pad), (0, 0)))
    grid = (Bp // tb,)

    slab = params["w_slab"]
    slab_rows = slab.shape[0]

    def batched(*blk):
        n = len(blk)
        return pl.BlockSpec(blk, lambda i, _n=n: (i,) + (0,) * (_n - 1))

    resident = pl.BlockSpec((slab_rows, LANES), lambda i: (0, 0))

    kernel = functools.partial(
        _attn_decoder_kernel,
        head_sizes=tuple(head_sizes), hidden_size=H, seq_len=S)

    # Advisory cost estimate so XLA schedules this small call sensibly.
    flops = Bp * (
        3 * S * H + 2 * S * H * S + 2 * S * S * H + 2 * S * H * H
        + 2 * (2 * H) * (4 * H) + 12 * H + 2 * H * LANES + 14 * LANES + 8 * S)
    transcendentals = Bp * (S * H + S + 2 * 4 * H + H + LANES)
    bytes_accessed = 4 * (Bp * (2 * H + S * H + LANES) + slab_rows * LANES)
    cost = pl.CostEstimate(flops=int(flops), transcendentals=int(transcendentals),
                           bytes_accessed=int(bytes_accessed))

    packed = pl.pallas_call(
        kernel,
        grid=grid,
        in_specs=[batched(tb, H), batched(tb, H), batched(tb, S * H), resident],
        out_specs=batched(tb, LANES),
        out_shape=jax.ShapeDtypeStruct((Bp, LANES), jnp.float32),
        compiler_params=pltpu.CompilerParams(dimension_semantics=("parallel",)),
        cost_estimate=cost,
    )(hidden2d, cell2d, enc_flat, slab)

    packed = packed[:B]
    outs = []
    off = 0
    for n in head_sizes:
        outs.append(packed[:, off:off + n])
        off += n
    h_new = packed[:, off:off + H]
    off += H
    c_new = packed[:, off:off + H]
    off += H
    attn_w = packed[:, off:off + S]
    return (*outs,
            h_new.reshape(1, B, H),    # new hidden (num_layers=1, B, H)
            c_new.reshape(1, B, H),    # new cell
            attn_w.reshape(B, 1, S))   # attn_weights as in PyTorch


def _reference_forward(hidden, cell_state, encoder_outputs, raw, head_sizes):
    """Pure-JAX reference mirroring the PyTorch forward (uses raw params)."""
    B, S, H = encoder_outputs.shape
    h0 = hidden.reshape(B, H)
    c0 = cell_state.reshape(B, H)
    align = jnp.tanh(hidden + encoder_outputs)                    # (B,S,H)
    scores = jnp.einsum("bsh,h->bs", align, raw["w_attn"][0]) + raw["b_attn"]
    attn_w = jax.nn.softmax(scores, axis=-1)                      # (B,S)
    attn_applied = jnp.einsum("bs,bsh->bh", attn_w, encoder_outputs)
    gates = (attn_applied @ raw["w_ih"] + h0 @ raw["w_hh"]
             + raw["b_ih"] + raw["b_hh"])
    i_g = jax.nn.sigmoid(gates[:, :H])
    f_g = jax.nn.sigmoid(gates[:, H:2 * H])
    g_g = jnp.tanh(gates[:, 2 * H:3 * H])
    o_g = jax.nn.sigmoid(gates[:, 3 * H:])
    c_new = f_g * c0 + i_g * g_g
    h_new = o_g * jnp.tanh(c_new)
    heads = [
        jax.nn.log_softmax(h_new @ raw["w_out"][k] + raw["b_out"][k], axis=-1)
        for k in range(len(head_sizes))
    ]
    return (*heads, h_new.reshape(1, B, H), c_new.reshape(1, B, H),
            attn_w.reshape(B, 1, S))


if __name__ == "__main__":
    B, S, H = 8, 8, 32
    head_sizes = (5, 4, 6, 3, 2)  # (shape, size, color, action, type)

    key = jax.random.PRNGKey(0)
    ks = jax.random.split(key, 20)

    # Deterministic synthetic parameters (matching the module __init__ shapes,
    # LSTM weights already transposed to (in, 4H), gate order i,f,g,o).
    raw = {
        "w_attn": 0.1 * jax.random.normal(ks[0], (1, H), jnp.float32),
        "b_attn": 0.1 * jax.random.normal(ks[1], (1,), jnp.float32),
        "w_ih": 0.1 * jax.random.normal(ks[2], (H, 4 * H), jnp.float32),
        "w_hh": 0.1 * jax.random.normal(ks[3], (H, 4 * H), jnp.float32),
        "b_ih": 0.1 * jax.random.normal(ks[4], (4 * H,), jnp.float32),
        "b_hh": 0.1 * jax.random.normal(ks[5], (4 * H,), jnp.float32),
        "w_out": [0.1 * jax.random.normal(ks[6 + k], (H, n), jnp.float32)
                  for k, n in enumerate(head_sizes)],
        "b_out": [0.1 * jax.random.normal(ks[11 + k], (n,), jnp.float32)
                  for k, n in enumerate(head_sizes)],
    }
    params = pack_params(raw, head_sizes, H)
    # TODO(synk): nn.Dropout is constructed in __init__ but never applied in forward(); omitted.

    hidden = jax.random.normal(ks[16], (B, 1, H), jnp.float32)
    cell_state = jax.random.normal(ks[17], (1, B, H), jnp.float32)
    encoder_outputs = jax.random.normal(ks[18], (B, S, H), jnp.float32)

    outs = attn_decoder_forward(hidden, cell_state, encoder_outputs, params,
                                head_sizes=head_sizes)
    outs = jax.block_until_ready(outs)
    refs = _reference_forward(hidden, cell_state, encoder_outputs, raw, head_sizes)
    for o, r in zip(outs, refs):
        assert o.shape == r.shape, (o.shape, r.shape)
        err = float(jnp.max(jnp.abs(o - r)))
        # Tolerance covers TPU MXU f32-emulation rounding on the structural matmuls.
        assert jnp.allclose(o, r, atol=1e-4, rtol=1e-4), err

    # Exercise the multi-block tiled path at the module's real BATCH_SIZE=512.
    B2 = 512
    hidden2 = jax.random.normal(ks[19], (B2, 1, H), jnp.float32)
    cell2 = jax.random.normal(ks[0], (1, B2, H), jnp.float32)
    enc2 = jax.random.normal(ks[1], (B2, S, H), jnp.float32)
    outs2 = jax.block_until_ready(
        attn_decoder_forward(hidden2, cell2, enc2, params, head_sizes=head_sizes))
    refs2 = _reference_forward(hidden2, cell2, enc2, raw, head_sizes)
    for o, r in zip(outs2, refs2):
        assert o.shape == r.shape, (o.shape, r.shape)
        err = float(jnp.max(jnp.abs(o - r)))
        assert jnp.allclose(o, r, atol=1e-4, rtol=1e-4), err

    print("KERNEL_OK")
</pallas_src>

<mosaic_0001>
module attributes {stable_mosaic.version = 11 : i64} {
  func.func @_attn_decoder_kernel(%arg0: i32, %arg1: memref<8x32xf32, #tpu.memory_space<vmem>>, %arg2: memref<8x32xf32, #tpu.memory_space<vmem>>, %arg3: memref<8x256xf32, #tpu.memory_space<vmem>>, %arg4: memref<120x128xf32, #tpu.memory_space<vmem>>, %arg5: memref<8x128xf32, #tpu.memory_space<vmem>>) attributes {dimension_semantics = [#tpu.dimension_semantics<parallel>], iteration_bounds = array<i64: 1>, scalar_prefetch = 0 : i64, scratch_operands = 0 : i64, tpu.core_type = #tpu.core_type<tc>, window_params = [{transform_indices = @transform_0, window_bounds = array<i64: 8, 32>}, {transform_indices = @transform_1, window_bounds = array<i64: 8, 32>}, {transform_indices = @transform_2, window_bounds = array<i64: 8, 256>}, {pipeline_mode = #tpu.pipeline_mode<synchronous>, transform_indices = @transform_3, window_bounds = array<i64: 120, 128>}, {transform_indices = @transform_4, window_bounds = array<i64: 8, 128>}]} {
    %c0 = arith.constant 0 : index
    %c0_0 = arith.constant 0 : index
    %0 = vector.load %arg1[%c0, %c0_0] : memref<8x32xf32, #tpu.memory_space<vmem>>, vector<8x32xf32>
    %c0_1 = arith.constant 0 : index
    %c0_2 = arith.constant 0 : index
    %1 = vector.load %arg2[%c0_1, %c0_2] : memref<8x32xf32, #tpu.memory_space<vmem>>, vector<8x32xf32>
    %c0_3 = arith.constant 0 : index
    %c0_4 = arith.constant 0 : index
    %2 = vector.load %arg3[%c0_3, %c0_4] : memref<8x256xf32, #tpu.memory_space<vmem>>, vector<8x256xf32>
    %c0_5 = arith.constant 0 : index
    %c0_6 = arith.constant 0 : index
    %3 = vector.load %arg4[%c0_5, %c0_6] : memref<120x128xf32, #tpu.memory_space<vmem>>, vector<64x128xf32>
    %c64 = arith.constant 64 : index
    %c0_7 = arith.constant 0 : index
    %4 = vector.load %arg4[%c64, %c0_7] : memref<120x128xf32, #tpu.memory_space<vmem>>, vector<32x128xf32>
    %c96 = arith.constant 96 : index
    %c0_8 = arith.constant 0 : index
    %5 = vector.load %arg4[%c96, %c0_8] : memref<120x128xf32, #tpu.memory_space<vmem>>, vector<1x32xf32>
    %c104 = arith.constant 104 : index
    %c0_9 = arith.constant 0 : index
    %6 = vector.load %arg4[%c104, %c0_9] : memref<120x128xf32, #tpu.memory_space<vmem>>, vector<1x128xf32>
    %c112 = arith.constant 112 : index
    %c0_10 = arith.constant 0 : index
    %7 = vector.load %arg4[%c112, %c0_10] : memref<120x128xf32, #tpu.memory_space<vmem>>, vector<1x128xf32>
    %8 = tpu.iota {dimensions = array<i32: 0>} : vector<32x32xi32>
    %9 = tpu.iota {dimensions = array<i32: 1>} : vector<32x32xi32>
    %10 = arith.cmpi eq, %8, %9 : vector<32x32xi32>
    %11 = arith.extui %10 : vector<32x32xi1> to vector<32x32xi32>
    %12 = arith.sitofp %11 : vector<32x32xi32> to vector<32x32xf32>
    %13 = tpu.concatenate %12, %12, %12, %12, %12, %12, %12, %12 in 0 : vector<32x32xf32>, vector<32x32xf32>, vector<32x32xf32>, vector<32x32xf32>, vector<32x32xf32>, vector<32x32xf32>, vector<32x32xf32>, vector<32x32xf32> -> vector<256x32xf32>
    %14 = tpu.iota {dimensions = array<i32: 0>} : vector<256x8xi32>
    %15 = tpu.iota {dimensions = array<i32: 1>} : vector<256x8xi32>
    %c32_i32 = arith.constant 32 : i32
    %16 = vector.broadcast %c32_i32 : i32 to vector<256x8xi32>
    %17 = arith.muli %15, %16 : vector<256x8xi32>
    %18 = arith.subi %14, %17 : vector<256x8xi32>
    %c0_i32 = arith.constant 0 : i32
    %19 = vector.broadcast %c0_i32 : i32 to vector<256x8xi32>
    %20 = arith.cmpi sge, %18, %19 : vector<256x8xi32>
    %c32_i32_11 = arith.constant 32 : i32
    %21 = vector.broadcast %c32_i32_11 : i32 to vector<256x8xi32>
    %22 = arith.cmpi slt, %18, %21 : vector<256x8xi32>
    %23 = arith.andi %20, %22 : vector<256x8xi1>
    %24 = arith.extui %23 : vector<256x8xi1> to vector<256x8xi32>
    %25 = arith.sitofp %24 : vector<256x8xi32> to vector<256x8xf32>
    %26 = tpu.iota {dimensions = array<i32: 0>} : vector<8x256xi32>
    %27 = tpu.iota {dimensions = array<i32: 1>} : vector<8x256xi32>
    %c32_i32_12 = arith.constant 32 : i32
    %28 = vector.broadcast %c32_i32_12 : i32 to vector<8x256xi32>
    %29 = arith.muli %26, %28 : vector<8x256xi32>
    %30 = arith.subi %27, %29 : vector<8x256xi32>
    %c0_i32_13 = arith.constant 0 : i32
    %31 = vector.broadcast %c0_i32_13 : i32 to vector<8x256xi32>
    %32 = arith.cmpi sge, %30, %31 : vector<8x256xi32>
    %c32_i32_14 = arith.constant 32 : i32
    %33 = vector.broadcast %c32_i32_14 : i32 to vector<8x256xi32>
    %34 = arith.cmpi slt, %30, %33 : vector<8x256xi32>
    %35 = arith.andi %32, %34 : vector<8x256xi1>
    %36 = arith.extui %35 : vector<8x256xi1> to vector<8x256xi32>
    %37 = arith.sitofp %36 : vector<8x256xi32> to vector<8x256xf32>
    %38 = tpu.concatenate %0, %0, %0, %0, %0, %0, %0, %0 in 1 : vector<8x32xf32>, vector<8x32xf32>, vector<8x32xf32>, vector<8x32xf32>, vector<8x32xf32>, vector<8x32xf32>, vector<8x32xf32>, vector<8x32xf32> -> vector<8x256xf32>
    %39 = tpu.concatenate %5, %5, %5, %5, %5, %5, %5, %5 in 1 : vector<1x32xf32>, vector<1x32xf32>, vector<1x32xf32>, vector<1x32xf32>, vector<1x32xf32>, vector<1x32xf32>, vector<1x32xf32>, vector<1x32xf32> -> vector<1x256xf32>
    %40 = arith.addf %38, %2 : vector<8x256xf32>
    %41 = math.tanh %40 : vector<8x256xf32>
    %42 = vector.broadcast %39 : vector<1x256xf32> to vector<8x256xf32>
    %43 = arith.mulf %41, %42 : vector<8x256xf32>
    %cst = arith.constant dense<0.000000e+00> : vector<8x8xf32>
    %44 = tpu.matmul %43, %25, %cst {dimension_numbers = #tpu.dot_dimension_numbers<[1], [0], [0], [1], [0, 0, 1, 1], [], []>} : vector<8x256xf32>, vector<256x8xf32>, vector<8x8xf32> -> vector<8x8xf32>
    %cst_15 = arith.constant dense<0xFF800000> : vector<8xf32>
    %45 = vector.multi_reduction <maximumf>, %44, %cst_15 [1] : vector<8x8xf32> to vector<8xf32>
    %46 = vector.shape_cast %45 : vector<8xf32> to vector<8x1xf32>
    %47 = vector.broadcast %46 : vector<8x1xf32> to vector<8x8xf32>
    %48 = arith.subf %44, %47 : vector<8x8xf32>
    %49 = math.exp %48 : vector<8x8xf32>
    %cst_16 = arith.constant dense<0.000000e+00> : vector<8xf32>
    %50 = vector.multi_reduction <add>, %49, %cst_16 [1] : vector<8x8xf32> to vector<8xf32>
    %51 = vector.shape_cast %50 : vector<8xf32> to vector<8x1xf32>
    %52 = tpu.reciprocal %51 : vector<8x1xf32> -> vector<8x1xf32>
    %53 = vector.broadcast %52 : vector<8x1xf32> to vector<8x8xf32>
    %54 = arith.mulf %49, %53 : vector<8x8xf32>
    %cst_17 = arith.constant dense<0.000000e+00> : vector<8x256xf32>
    %55 = tpu.matmul %54, %37, %cst_17 {dimension_numbers = #tpu.dot_dimension_numbers<[1], [0], [0], [1], [0, 0, 1, 1], [], []>} : vector<8x8xf32>, vector<8x256xf32>, vector<8x256xf32> -> vector<8x256xf32>
    %56 = arith.mulf %55, %2 : vector<8x256xf32>
    %cst_18 = arith.constant dense<0.000000e+00> : vector<8x32xf32>
    %57 = tpu.matmul %56, %13, %cst_18 {dimension_numbers = #tpu.dot_dimension_numbers<[1], [0], [0], [1], [0, 0, 1, 1], [], []>} : vector<8x256xf32>, vector<256x32xf32>, vector<8x32xf32> -> vector<8x32xf32>
    %58 = tpu.concatenate %57, %0 in 1 : vector<8x32xf32>, vector<8x32xf32> -> vector<8x64xf32>
    %cst_19 = arith.constant dense<0.000000e+00> : vector<8x128xf32>
    %59 = tpu.matmul %58, %3, %cst_19 {dimension_numbers = #tpu.dot_dimension_numbers<[1], [0], [0], [1], [0, 0, 1, 1], [], []>} : vector<8x64xf32>, vector<64x128xf32>, vector<8x128xf32> -> vector<8x128xf32>
    %60 = vector.broadcast %6 : vector<1x128xf32> to vector<8x128xf32>
    %61 = arith.addf %59, %60 : vector<8x128xf32>
    %62 = arith.negf %61 : vector<8x128xf32>
    %63 = math.exp %62 : vector<8x128xf32>
    %cst_20 = arith.constant 1.000000e+00 : f32
    %64 = vector.broadcast %cst_20 : f32 to vector<8x128xf32>
    %65 = arith.addf %64, %63 : vector<8x128xf32>
    %66 = arith.divf %64, %65 : vector<8x128xf32>
    %67 = math.tanh %61 : vector<8x128xf32>
    %68 = vector.extract_strided_slice %66 {offsets = [0, 0], sizes = [8, 32], strides = [1, 1]} : vector<8x128xf32> to vector<8x32xf32>
    %69 = vector.extract_strided_slice %66 {offsets = [0, 32], sizes = [8, 32], strides = [1, 1]} : vector<8x128xf32> to vector<8x32xf32>
    %70 = vector.extract_strided_slice %67 {offsets = [0, 64], sizes = [8, 32], strides = [1, 1]} : vector<8x128xf32> to vector<8x32xf32>
    %71 = vector.extract_strided_slice %66 {offsets = [0, 96], sizes = [8, 32], strides = [1, 1]} : vector<8x128xf32> to vector<8x32xf32>
    %72 = arith.mulf %69, %1 : vector<8x32xf32>
    %73 = arith.mulf %68, %70 : vector<8x32xf32>
    %74 = arith.addf %72, %73 : vector<8x32xf32>
    %75 = math.tanh %74 : vector<8x32xf32>
    %76 = arith.mulf %71, %75 : vector<8x32xf32>
    %cst_21 = arith.constant dense<0.000000e+00> : vector<8x128xf32>
    %77 = tpu.matmul %76, %4, %cst_21 {dimension_numbers = #tpu.dot_dimension_numbers<[1], [0], [0], [1], [0, 0, 1, 1], [], []>} : vector<8x32xf32>, vector<32x128xf32>, vector<8x128xf32> -> vector<8x128xf32>
    %78 = vector.broadcast %7 : vector<1x128xf32> to vector<8x128xf32>
    %79 = arith.addf %77, %78 : vector<8x128xf32>
    %80 = tpu.iota {dimensions = array<i32: 1>} : vector<1x128xi32>
    %cst_22 = arith.constant 0.000000e+00 : f32
    %81 = vector.broadcast %cst_22 : f32 to vector<8x128xf32>
    %c0_i32_23 = arith.constant 0 : i32
    %82 = vector.broadcast %c0_i32_23 : i32 to vector<1x128xi32>
    %83 = arith.cmpi sge, %80, %82 : vector<1x128xi32>
    %c5_i32 = arith.constant 5 : i32
    %84 = vector.broadcast %c5_i32 : i32 to vector<1x128xi32>
    %85 = arith.cmpi slt, %80, %84 : vector<1x128xi32>
    %86 = arith.andi %83, %85 : vector<1x128xi1>
    %cst_24 = arith.constant 0xFF800000 : f32
    %87 = vector.shape_cast %86 : vector<1x128xi1> to vector<1x128xi1>
    %88 = vector.broadcast %87 : vector<1x128xi1> to vector<8x128xi1>
    %89 = vector.broadcast %cst_24 : f32 to vector<8x128xf32>
    %90 = arith.select %88, %79, %89 : vector<8x128xi1>, vector<8x128xf32>
    %cst_25 = arith.constant dense<0xFF800000> : vector<8xf32>
    %91 = vector.multi_reduction <maximumf>, %90, %cst_25 [1] : vector<8x128xf32> to vector<8xf32>
    %92 = vector.shape_cast %91 : vector<8xf32> to vector<8x1xf32>
    %93 = vector.shape_cast %86 : vector<1x128xi1> to vector<1x128xi1>
    %94 = vector.broadcast %93 : vector<1x128xi1> to vector<8x128xi1>
    %95 = vector.shape_cast %92 : vector<8x1xf32> to vector<8x1xf32>
    %96 = vector.broadcast %95 : vector<8x1xf32> to vector<8x128xf32>
    %97 = arith.select %94, %96, %81 : vector<8x128xi1>, vector<8x128xf32>
    %c5_i32_26 = arith.constant 5 : i32
    %98 = vector.broadcast %c5_i32_26 : i32 to vector<1x128xi32>
    %99 = arith.cmpi sge, %80, %98 : vector<1x128xi32>
    %c9_i32 = arith.constant 9 : i32
    %100 = vector.broadcast %c9_i32 : i32 to vector<1x128xi32>
    %101 = arith.cmpi slt, %80, %100 : vector<1x128xi32>
    %102 = arith.andi %99, %101 : vector<1x128xi1>
    %cst_27 = arith.constant 0xFF800000 : f32
    %103 = vector.shape_cast %102 : vector<1x128xi1> to vector<1x128xi1>
    %104 = vector.broadcast %103 : vector<1x128xi1> to vector<8x128xi1>
    %105 = vector.broadcast %cst_27 : f32 to vector<8x128xf32>
    %106 = arith.select %104, %79, %105 : vector<8x128xi1>, vector<8x128xf32>
    %cst_28 = arith.constant dense<0xFF800000> : vector<8xf32>
    %107 = vector.multi_reduction <maximumf>, %106, %cst_28 [1] : vector<8x128xf32> to vector<8xf32>
    %108 = vector.shape_cast %107 : vector<8xf32> to vector<8x1xf32>
    %109 = vector.shape_cast %102 : vector<1x128xi1> to vector<1x128xi1>
    %110 = vector.broadcast %109 : vector<1x128xi1> to vector<8x128xi1>
    %111 = vector.shape_cast %108 : vector<8x1xf32> to vector<8x1xf32>
    %112 = vector.broadcast %111 : vector<8x1xf32> to vector<8x128xf32>
    %113 = arith.select %110, %112, %97 : vector<8x128xi1>, vector<8x128xf32>
    %c9_i32_29 = arith.constant 9 : i32
    %114 = vector.broadcast %c9_i32_29 : i32 to vector<1x128xi32>
    %115 = arith.cmpi sge, %80, %114 : vector<1x128xi32>
    %c15_i32 = arith.constant 15 : i32
    %116 = vector.broadcast %c15_i32 : i32 to vector<1x128xi32>
    %117 = arith.cmpi slt, %80, %116 : vector<1x128xi32>
    %118 = arith.andi %115, %117 : vector<1x128xi1>
    %cst_30 = arith.constant 0xFF800000 : f32
    %119 = vector.shape_cast %118 : vector<1x128xi1> to vector<1x128xi1>
    %120 = vector.broadcast %119 : vector<1x128xi1> to vector<8x128xi1>
    %121 = vector.broadcast %cst_30 : f32 to vector<8x128xf32>
    %122 = arith.select %120, %79, %121 : vector<8x128xi1>, vector<8x128xf32>
    %cst_31 = arith.constant dense<0xFF800000> : vector<8xf32>
    %123 = vector.multi_reduction <maximumf>, %122, %cst_31 [1] : vector<8x128xf32> to vector<8xf32>
    %124 = vector.shape_cast %123 : vector<8xf32> to vector<8x1xf32>
    %125 = vector.shape_cast %118 : vector<1x128xi1> to vector<1x128xi1>
    %126 = vector.broadcast %125 : vector<1x128xi1> to vector<8x128xi1>
    %127 = vector.shape_cast %124 : vector<8x1xf32> to vector<8x1xf32>
    %128 = vector.broadcast %127 : vector<8x1xf32> to vector<8x128xf32>
    %129 = arith.select %126, %128, %113 : vector<8x128xi1>, vector<8x128xf32>
    %c15_i32_32 = arith.constant 15 : i32
    %130 = vector.broadcast %c15_i32_32 : i32 to vector<1x128xi32>
    %131 = arith.cmpi sge, %80, %130 : vector<1x128xi32>
    %c18_i32 = arith.constant 18 : i32
    %132 = vector.broadcast %c18_i32 : i32 to vector<1x128xi32>
    %133 = arith.cmpi slt, %80, %132 : vector<1x128xi32>
    %134 = arith.andi %131, %133 : vector<1x128xi1>
    %cst_33 = arith.constant 0xFF800000 : f32
    %135 = vector.shape_cast %134 : vector<1x128xi1> to vector<1x128xi1>
    %136 = vector.broadcast %135 : vector<1x128xi1> to vector<8x128xi1>
    %137 = vector.broadcast %cst_33 : f32 to vector<8x128xf32>
    %138 = arith.select %136, %79, %137 : vector<8x128xi1>, vector<8x128xf32>
    %cst_34 = arith.constant dense<0xFF800000> : vector<8xf32>
    %139 = vector.multi_reduction <maximumf>, %138, %cst_34 [1] : vector<8x128xf32> to vector<8xf32>
    %140 = vector.shape_cast %139 : vector<8xf32> to vector<8x1xf32>
    %141 = vector.shape_cast %134 : vector<1x128xi1> to vector<1x128xi1>
    %142 = vector.broadcast %141 : vector<1x128xi1> to vector<8x128xi1>
    %143 = vector.shape_cast %140 : vector<8x1xf32> to vector<8x1xf32>
    %144 = vector.broadcast %143 : vector<8x1xf32> to vector<8x128xf32>
    %145 = arith.select %142, %144, %129 : vector<8x128xi1>, vector<8x128xf32>
    %c18_i32_35 = arith.constant 18 : i32
    %146 = vector.broadcast %c18_i32_35 : i32 to vector<1x128xi32>
    %147 = arith.cmpi sge, %80, %146 : vector<1x128xi32>
    %c20_i32 = arith.constant 20 : i32
    %148 = vector.broadcast %c20_i32 : i32 to vector<1x128xi32>
    %149 = arith.cmpi slt, %80, %148 : vector<1x128xi32>
    %150 = arith.andi %147, %149 : vector<1x128xi1>
    %cst_36 = arith.constant 0xFF800000 : f32
    %151 = vector.shape_cast %150 : vector<1x128xi1> to vector<1x128xi1>
    %152 = vector.broadcast %151 : vector<1x128xi1> to vector<8x128xi1>
    %153 = vector.broadcast %cst_36 : f32 to vector<8x128xf32>
    %154 = arith.select %152, %79, %153 : vector<8x128xi1>, vector<8x128xf32>
    %cst_37 = arith.constant dense<0xFF800000> : vector<8xf32>
    %155 = vector.multi_reduction <maximumf>, %154, %cst_37 [1] : vector<8x128xf32> to vector<8xf32>
    %156 = vector.shape_cast %155 : vector<8xf32> to vector<8x1xf32>
    %157 = vector.shape_cast %150 : vector<1x128xi1> to vector<1x128xi1>
    %158 = vector.broadcast %157 : vector<1x128xi1> to vector<8x128xi1>
    %159 = vector.shape_cast %156 : vector<8x1xf32> to vector<8x1xf32>
    %160 = vector.broadcast %159 : vector<8x1xf32> to vector<8x128xf32>
    %161 = arith.select %158, %160, %145 : vector<8x128xi1>, vector<8x128xf32>
    %162 = arith.subf %79, %161 : vector<8x128xf32>
    %163 = math.exp %162 : vector<8x128xf32>
    %cst_38 = arith.constant 0.000000e+00 : f32
    %164 = vector.broadcast %cst_38 : f32 to vector<8x128xf32>
    %cst_39 = arith.constant 0.000000e+00 : f32
    %165 = vector.shape_cast %86 : vector<1x128xi1> to vector<1x128xi1>
    %166 = vector.broadcast %165 : vector<1x128xi1> to vector<8x128xi1>
    %167 = vector.broadcast %cst_39 : f32 to vector<8x128xf32>
    %168 = arith.select %166, %163, %167 : vector<8x128xi1>, vector<8x128xf32>
    %cst_40 = arith.constant dense<0.000000e+00> : vector<8xf32>
    %169 = vector.multi_reduction <add>, %168, %cst_40 [1] : vector<8x128xf32> to vector<8xf32>
    %170 = vector.shape_cast %169 : vector<8xf32> to vector<8x1xf32>
    %171 = math.log %170 : vector<8x1xf32>
    %172 = vector.shape_cast %86 : vector<1x128xi1> to vector<1x128xi1>
    %173 = vector.broadcast %172 : vector<1x128xi1> to vector<8x128xi1>
    %174 = vector.shape_cast %171 : vector<8x1xf32> to vector<8x1xf32>
    %175 = vector.broadcast %174 : vector<8x1xf32> to vector<8x128xf32>
    %176 = arith.select %173, %175, %164 : vector<8x128xi1>, vector<8x128xf32>
    %cst_41 = arith.constant 0.000000e+00 : f32
    %177 = vector.shape_cast %102 : vector<1x128xi1> to vector<1x128xi1>
    %178 = vector.broadcast %177 : vector<1x128xi1> to vector<8x128xi1>
    %179 = vector.broadcast %cst_41 : f32 to vector<8x128xf32>
    %180 = arith.select %178, %163, %179 : vector<8x128xi1>, vector<8x128xf32>
    %cst_42 = arith.constant dense<0.000000e+00> : vector<8xf32>
    %181 = vector.multi_reduction <add>, %180, %cst_42 [1] : vector<8x128xf32> to vector<8xf32>
    %182 = vector.shape_cast %181 : vector<8xf32> to vector<8x1xf32>
    %183 = math.log %182 : vector<8x1xf32>
    %184 = vector.shape_cast %102 : vector<1x128xi1> to vector<1x128xi1>
    %185 = vector.broadcast %184 : vector<1x128xi1> to vector<8x128xi1>
    %186 = vector.shape_cast %183 : vector<8x1xf32> to vector<8x1xf32>
    %187 = vector.broadcast %186 : vector<8x1xf32> to vector<8x128xf32>
    %188 = arith.select %185, %187, %176 : vector<8x128xi1>, vector<8x128xf32>
    %cst_43 = arith.constant 0.000000e+00 : f32
    %189 = vector.shape_cast %118 : vector<1x128xi1> to vector<1x128xi1>
    %190 = vector.broadcast %189 : vector<1x128xi1> to vector<8x128xi1>
    %191 = vector.broadcast %cst_43 : f32 to vector<8x128xf32>
    %192 = arith.select %190, %163, %191 : vector<8x128xi1>, vector<8x128xf32>
    %cst_44 = arith.constant dense<0.000000e+00> : vector<8xf32>
    %193 = vector.multi_reduction <add>, %192, %cst_44 [1] : vector<8x128xf32> to vector<8xf32>
    %194 = vector.shape_cast %193 : vector<8xf32> to vector<8x1xf32>
    %195 = math.log %194 : vector<8x1xf32>
    %196 = vector.shape_cast %118 : vector<1x128xi1> to vector<1x128xi1>
    %197 = vector.broadcast %196 : vector<1x128xi1> to vector<8x128xi1>
    %198 = vector.shape_cast %195 : vector<8x1xf32> to vector<8x1xf32>
    %199 = vector.broadcast %198 : vector<8x1xf32> to vector<8x128xf32>
    %200 = arith.select %197, %199, %188 : vector<8x128xi1>, vector<8x128xf32>
    %cst_45 = arith.constant 0.000000e+00 : f32
    %201 = vector.shape_cast %134 : vector<1x128xi1> to vector<1x128xi1>
    %202 = vector.broadcast %201 : vector<1x128xi1> to vector<8x128xi1>
    %203 = vector.broadcast %cst_45 : f32 to vector<8x128xf32>
    %204 = arith.select %202, %163, %203 : vector<8x128xi1>, vector<8x128xf32>
    %cst_46 = arith.constant dense<0.000000e+00> : vector<8xf32>
    %205 = vector.multi_reduction <add>, %204, %cst_46 [1] : vector<8x128xf32> to vector<8xf32>
    %206 = vector.shape_cast %205 : vector<8xf32> to vector<8x1xf32>
    %207 = math.log %206 : vector<8x1xf32>
    %208 = vector.shape_cast %134 : vector<1x128xi1> to vector<1x128xi1>
    %209 = vector.broadcast %208 : vector<1x128xi1> to vector<8x128xi1>
    %210 = vector.shape_cast %207 : vector<8x1xf32> to vector<8x1xf32>
    %211 = vector.broadcast %210 : vector<8x1xf32> to vector<8x128xf32>
    %212 = arith.select %209, %211, %200 : vector<8x128xi1>, vector<8x128xf32>
    %cst_47 = arith.constant 0.000000e+00 : f32
    %213 = vector.shape_cast %150 : vector<1x128xi1> to vector<1x128xi1>
    %214 = vector.broadcast %213 : vector<1x128xi1> to vector<8x128xi1>
    %215 = vector.broadcast %cst_47 : f32 to vector<8x128xf32>
    %216 = arith.select %214, %163, %215 : vector<8x128xi1>, vector<8x128xf32>
    %cst_48 = arith.constant dense<0.000000e+00> : vector<8xf32>
    %217 = vector.multi_reduction <add>, %216, %cst_48 [1] : vector<8x128xf32> to vector<8xf32>
    %218 = vector.shape_cast %217 : vector<8xf32> to vector<8x1xf32>
    %219 = math.log %218 : vector<8x1xf32>
    %220 = vector.shape_cast %150 : vector<1x128xi1> to vector<1x128xi1>
    %221 = vector.broadcast %220 : vector<1x128xi1> to vector<8x128xi1>
    %222 = vector.shape_cast %219 : vector<8x1xf32> to vector<8x1xf32>
    %223 = vector.broadcast %222 : vector<8x1xf32> to vector<8x128xf32>
    %224 = arith.select %221, %223, %212 : vector<8x128xi1>, vector<8x128xf32>
    %225 = arith.subf %162, %224 : vector<8x128xf32>
    %226 = vector.extract_strided_slice %225 {offsets = [0, 0], sizes = [8, 20], strides = [1, 1]} : vector<8x128xf32> to vector<8x20xf32>
    %cst_49 = arith.constant 0.000000e+00 : f32
    %227 = vector.broadcast %cst_49 : f32 to vector<8x36xf32>
    %228 = tpu.concatenate %226, %76, %74, %54, %227 in 1 : vector<8x20xf32>, vector<8x32xf32>, vector<8x32xf32>, vector<8x8xf32>, vector<8x36xf32> -> vector<8x128xf32>
    %c0_50 = arith.constant 0 : index
    %c0_51 = arith.constant 0 : index
    %229 = vector.load %arg5[%c0_50, %c0_51] : memref<8x128xf32, #tpu.memory_space<vmem>>, vector<8x128xf32>
    tpu.vector_store %arg5[%c0_50, %c0_51], %228 {strides = array<i32>} : memref<8x128xf32, #tpu.memory_space<vmem>>, vector<8x128xf32>,
    return
  }
  func.func @transform_0(%arg0: i32) -> (i32, i32) {
    %c0_i32 = arith.constant 0 : i32
    %c0_i32_0 = arith.constant 0 : i32
    return %arg0, %c0_i32 : i32, i32
  }
  func.func @transform_1(%arg0: i32) -> (i32, i32) {
    %c0_i32 = arith.constant 0 : i32
    %c0_i32_0 = arith.constant 0 : i32
    return %arg0, %c0_i32 : i32, i32
  }
  func.func @transform_2(%arg0: i32) -> (i32, i32) {
    %c0_i32 = arith.constant 0 : i32
    %c0_i32_0 = arith.constant 0 : i32
    return %arg0, %c0_i32 : i32, i32
  }
  func.func @transform_3(%arg0: i32) -> (i32, i32) {
    %c0_i32 = arith.constant 0 : i32
    %c0_i32_0 = arith.constant 0 : i32
    %c0_i32_1 = arith.constant 0 : i32
    return %c0_i32, %c0_i32_0 : i32, i32
  }
  func.func @transform_4(%arg0: i32) -> (i32, i32) {
    %c0_i32 = arith.constant 0 : i32
    %c0_i32_0 = arith.constant 0 : i32
    return %arg0, %c0_i32 : i32, i32
  }
}

</mosaic_0001>

<llo_original>
// kernel: attn_decoder_forward.1
$region0: #{attn_decoder_forward.1}
  #allocation0 [shape = 'u32[]', space=smem, size = 0x4, offset = 0x4, fixed_abs, tag = 'smem constant byte address 0x4 - core index']
  #allocation1 [shape = 'u32[144,128]{1,0:T(1,128)}', space=vmem, size = 0x12000, scoped, tag = 'internal scratch']
  %s0 = inlined_call_operand.vmem [shape: f32[8,32], index: 0, kind: input, shape index: {}]
  %s1 = inlined_call_operand.vmem [shape: f32[8,32], index: 1, kind: input, shape index: {}]
  %s2 = inlined_call_operand.vmem [shape: f32[8,256], index: 2, kind: input, shape index: {}]
  %s3 = inlined_call_operand.hbm [shape: f32[120,128], index: 3, kind: input, shape index: {}]
  %s4 = inlined_call_operand.vmem [shape: f32[8,128], index: 4, kind: output, shape index: {}]
  %s5 = sld [smem:[#allocation0]]
  $region30: #{attn_decoder_forward.1} parent=0
    _
  %s7 = ssub.s32 1, %s5
  %s8 = scalar_select 0, %s7, %s5
  $region1: #{attn_decoder_forward.1} parent=0
    #allocation2 [shape = 'u8[61440]{0}', space=vmem, size = 0xf000, scoped, tag = 'input window, operand 3, single buffered']
    #allocation3 [shape = 's32[1]{0}', space=sflag, size = 0x4, scoped, tag = 'scoped memory for attn_decoder_forward.1']
    %9 = vsyncpa [#allocation3], 0
    // Predicated region
    $region2: #{attn_decoder_forward.1} parent=1 // pred_check
      _
    $region3: #{attn_decoder_forward.1} parent=1 // pred_check_branch
      %11 = sbr.rel (0) target = $region5
    $region4: #{attn_decoder_forward.1} parent=1 // pred_region
      _
    $region5: #{attn_decoder_forward.1} parent=1 // pred_fallthru
      _
    // Predicated region
    $region6: #{attn_decoder_forward.1} parent=1 // pred_check
      _
    $region7: #{attn_decoder_forward.1} parent=1 // pred_check_branch
      %13 = sbr.rel (0) target = $region9
    $region8: #{attn_decoder_forward.1} parent=1 // pred_region
      _
    $region9: #{attn_decoder_forward.1} parent=1 // pred_fallthru
      _
    // Predicated region
    $region10: #{attn_decoder_forward.1} parent=1 // pred_check
      _
    $region11: #{attn_decoder_forward.1} parent=1 // pred_check_branch
      %15 = sbr.rel (0) target = $region13
    $region12: #{attn_decoder_forward.1} parent=1 // pred_region
      _
    $region13: #{attn_decoder_forward.1} parent=1 // pred_fallthru
      _
    // Predicated region
    $region14: #{attn_decoder_forward.1} parent=1 // pred_check
      _
    $region15: #{attn_decoder_forward.1} parent=1 // pred_check_branch
      %17 = sbr.rel (0) target = $region17
    $region16: #{attn_decoder_forward.1} parent=1 // pred_region
      %s19 = ssub.s32 1920, 1920
      %20 = vsyncadd [#allocation3], %s19
      %s21 = sshll.u32 [#allocation2], 4
      %s22 = int_to_ptr.vmem [resolvable:$true] %s21
      %27 = dma.hbm_to_vmem [thread:$0]  %s3, 1920, %s22, [#allocation3], 128, 128, 8
    $region17: #{attn_decoder_forward.1} parent=1 // pred_fallthru
      _
    // Predicated region
    $region18: #{attn_decoder_forward.1} parent=1 // pred_check
      _
    $region19: #{attn_decoder_forward.1} parent=1 // pred_check_branch
      %29 = sbr.rel (0) target = $region21
    $region20: #{attn_decoder_forward.1} parent=1 // pred_region
      %30 = dma.done [#allocation3], 1920
    $region21: #{attn_decoder_forward.1} parent=1 // pred_fallthru
      _
    %v31 = vld [vmem:[%s0] sm:$0xff]
    %v32 = vld [vmem:[%s1] sm:$0xff]
    %v33 = vld [vmem:[%s2] sm:$0xff]
    %v34 = vld [vmem:[%s2 + $0x8] sm:$0xff]
    %v35 = vld [vmem:[#allocation2] sm:$0xff]
    %v36 = vld [vmem:[#allocation2 + $0x8] sm:$0xff]
    %v37 = vld [vmem:[#allocation2 + $0x10] sm:$0xff]
    %v38 = vld [vmem:[#allocation2 + $0x18] sm:$0xff]
    %v39 = vld [vmem:[#allocation2 + $0x20] sm:$0xff]
    %v40 = vld [vmem:[#allocation2 + $0x28] sm:$0xff]
    %v41 = vld [vmem:[#allocation2 + $0x30] sm:$0xff]
    %v42 = vld [vmem:[#allocation2 + $0x38] sm:$0xff]
    %v43 = vld [vmem:[#allocation2 + $0x40] sm:$0xff]
    %v44 = vld [vmem:[#allocation2 + $0x48] sm:$0xff]
    %v45 = vld [vmem:[#allocation2 + $0x50] sm:$0xff]
    %v46 = vld [vmem:[#allocation2 + $0x58] sm:$0xff]
    %v47 = vld [vmem:[#allocation2 + $0x60] sm:$0x1]
    %v48 = vld [vmem:[#allocation2 + $0x68] sm:$0x1]
    %v49 = vld [vmem:[#allocation2 + $0x70] sm:$0x1]
    %v50 = vlaneseq
    %v51 = vshrl.u32 %v50, 7
    %v52 = vadd.s32 %v51, 8
    %v53 = vadd.s32 %v51, 16
    %v54 = vadd.s32 %v51, 24
    %v55 = vlaneseq
    %v56 = vand.u32 %v55, 127
    %vm57 = vcmp.eq.s32.totalorder %v51, %v56
    %vm58 = vcmp.eq.s32.totalorder %v52, %v56
    %vm59 = vcmp.eq.s32.totalorder %v53, %v56
    %vm60 = vcmp.eq.s32.totalorder %v54, %v56
    %v61 = vsel %vm57, 1, 0
    %v62 = vsel %vm58, 1, 0
    %v63 = vsel %vm59, 1, 0
    %v64 = vsel %vm60, 1, 0
    %v65 = vcvt.s32.f32 %v61
    %v66 = vcvt.s32.f32 %v62
    %v67 = vcvt.s32.f32 %v63
    %v68 = vcvt.s32.f32 %v64
    %v69 = vadd.s32 %v51, 32
    %v70 = vadd.s32 %v51, 40
    %v71 = vadd.s32 %v51, 48
    %v72 = vadd.s32 %v51, 56
    %v73 = vadd.s32 %v51, 64
    %v74 = vadd.s32 %v51, 72
    %v75 = vadd.s32 %v51, 80
    %v76 = vadd.s32 %v51, 88
    %v77 = vadd.s32 %v51, 96
    %v78 = vadd.s32 %v51, 104
    %v79 = vadd.s32 %v51, 112
    %v80 = vadd.s32 %v51, 120
    %v81 = vadd.s32 %v51, 128
    %v82 = vadd.s32 %v51, 136
    %v83 = vadd.s32 %v51, 144
    %v84 = vadd.s32 %v51, 152
    %v85 = vadd.s32 %v51, 160
    %v86 = vadd.s32 %v51, 168
    %v87 = vadd.s32 %v51, 176
    %v88 = vadd.s32 %v51, 184
    %v89 = vadd.s32 %v51, 192
    %v90 = vadd.s32 %v51, 200
    %v91 = vadd.s32 %v51, 208
    %v92 = vadd.s32 %v51, 216
    %v93 = vadd.s32 %v51, 224
    %v94 = vadd.s32 %v51, 232
    %v95 = vadd.s32 %v51, 240
    %v96 = vadd.s32 %v51, 248
    %v97 = vmul.u32 %v56, 32
    %v98 = vsub.s32 %v51, %v97
    %v99 = vsub.s32 %v52, %v97
    %v100 = vsub.s32 %v53, %v97
    %v101 = vsub.s32 %v54, %v97
    %v102 = vsub.s32 %v69, %v97
    %v103 = vsub.s32 %v70, %v97
    %v104 = vsub.s32 %v71, %v97
    %v105 = vsub.s32 %v72, %v97
    %v106 = vsub.s32 %v73, %v97
    %v107 = vsub.s32 %v74, %v97
    %v108 = vsub.s32 %v75, %v97
    %v109 = vsub.s32 %v76, %v97
    %v110 = vsub.s32 %v77, %v97
    %v111 = vsub.s32 %v78, %v97
    %v112 = vsub.s32 %v79, %v97
    %v113 = vsub.s32 %v80, %v97
    %v114 = vsub.s32 %v81, %v97
    %v115 = vsub.s32 %v82, %v97
    %v116 = vsub.s32 %v83, %v97
    %v117 = vsub.s32 %v84, %v97
    %v118 = vsub.s32 %v85, %v97
    %v119 = vsub.s32 %v86, %v97
    %v120 = vsub.s32 %v87, %v97
    %v121 = vsub.s32 %v88, %v97
    %v122 = vsub.s32 %v89, %v97
    %v123 = vsub.s32 %v90, %v97
    %v124 = vsub.s32 %v91, %v97
    %v125 = vsub.s32 %v92, %v97
    %v126 = vsub.s32 %v93, %v97
    %v127 = vsub.s32 %v94, %v97
    %v128 = vsub.s32 %v95, %v97
    %v129 = vsub.s32 %v96, %v97
    %vm130 = vcmp.ge.s32.totalorder %v98, 0
    %vm131 = vcmp.ge.s32.totalorder %v99, 0
    %vm132 = vcmp.ge.s32.totalorder %v100, 0
    %vm133 = vcmp.ge.s32.totalorder %v101, 0
    %vm134 = vcmp.ge.s32.totalorder %v102, 0
    %vm135 = vcmp.ge.s32.totalorder %v103, 0
    %vm136 = vcmp.ge.s32.totalorder %v104, 0
    %vm137 = vcmp.ge.s32.totalorder %v105, 0
    %vm138 = vcmp.ge.s32.totalorder %v106, 0
    %vm139 = vcmp.ge.s32.totalorder %v107, 0
    %vm140 = vcmp.ge.s32.totalorder %v108, 0
    %vm141 = vcmp.ge.s32.totalorder %v109, 0
    %vm142 = vcmp.ge.s32.totalorder %v110, 0
    %vm143 = vcmp.ge.s32.totalorder %v111, 0
    %vm144 = vcmp.ge.s32.totalorder %v112, 0
    %vm145 = vcmp.ge.s32.totalorder %v113, 0
    %vm146 = vcmp.ge.s32.totalorder %v114, 0
    %vm147 = vcmp.ge.s32.totalorder %v115, 0
    %vm148 = vcmp.ge.s32.totalorder %v116, 0
    %vm149 = vcmp.ge.s32.totalorder %v117, 0
    %vm150 = vcmp.ge.s32.totalorder %v118, 0
    %vm151 = vcmp.ge.s32.totalorder %v119, 0
    %vm152 = vcmp.ge.s32.totalorder %v120, 0
    %vm153 = vcmp.ge.s32.totalorder %v121, 0
    %vm154 = vcmp.ge.s32.totalorder %v122, 0
    %vm155 = vcmp.ge.s32.totalorder %v123, 0
    %vm156 = vcmp.ge.s32.totalorder %v124, 0
    %vm157 = vcmp.ge.s32.totalorder %v125, 0
    %vm158 = vcmp.ge.s32.totalorder %v126, 0
    %vm159 = vcmp.ge.s32.totalorder %v127, 0
    %vm160 = vcmp.ge.s32.totalorder %v128, 0
    %vm161 = vcmp.ge.s32.totalorder %v129, 0
    %vm162 = vcmp.lt.s32.totalorder %v98, 32
    %vm163 = vcmp.lt.s32.totalorder %v99, 32
    %vm164 = vcmp.lt.s32.totalorder %v100, 32
    %vm165 = vcmp.lt.s32.totalorder %v101, 32
    %vm166 = vcmp.lt.s32.totalorder %v102, 32
    %vm167 = vcmp.lt.s32.totalorder %v103, 32
    %vm168 = vcmp.lt.s32.totalorder %v104, 32
    %vm169 = vcmp.lt.s32.totalorder %v105, 32
    %vm170 = vcmp.lt.s32.totalorder %v106, 32
    %vm171 = vcmp.lt.s32.totalorder %v107, 32
    %vm172 = vcmp.lt.s32.totalorder %v108, 32
    %vm173 = vcmp.lt.s32.totalorder %v109, 32
    %vm174 = vcmp.lt.s32.totalorder %v110, 32
    %vm175 = vcmp.lt.s32.totalorder %v111, 32
    %vm176 = vcmp.lt.s32.totalorder %v112, 32
    %vm177 = vcmp.lt.s32.totalorder %v113, 32
    %vm178 = vcmp.lt.s32.totalorder %v114, 32
    %vm179 = vcmp.lt.s32.totalorder %v115, 32
    %vm180 = vcmp.lt.s32.totalorder %v116, 32
    %vm181 = vcmp.lt.s32.totalorder %v117, 32
    %vm182 = vcmp.lt.s32.totalorder %v118, 32
    %vm183 = vcmp.lt.s32.totalorder %v119, 32
    %vm184 = vcmp.lt.s32.totalorder %v120, 32
    %vm185 = vcmp.lt.s32.totalorder %v121, 32
    %vm186 = vcmp.lt.s32.totalorder %v122, 32
    %vm187 = vcmp.lt.s32.totalorder %v123, 32
    %vm188 = vcmp.lt.s32.totalorder %v124, 32
    %vm189 = vcmp.lt.s32.totalorder %v125, 32
    %vm190 = vcmp.lt.s32.totalorder %v126, 32
    %vm191 = vcmp.lt.s32.totalorder %v127, 32
    %vm192 = vcmp.lt.s32.totalorder %v128, 32
    %vm193 = vcmp.lt.s32.totalorder %v129, 32
    %vm194 = vmand %vm130, %vm162
    %vm195 = vmand %vm131, %vm163
    %vm196 = vmand %vm132, %vm164
    %vm197 = vmand %vm133, %vm165
    %vm198 = vmand %vm134, %vm166
    %vm199 = vmand %vm135, %vm167
    %vm200 = vmand %vm136, %vm168
    %vm201 = vmand %vm137, %vm169
    %vm202 = vmand %vm138, %vm170
    %vm203 = vmand %vm139, %vm171
    %vm204 = vmand %vm140, %vm172
    %vm205 = vmand %vm141, %vm173
    %vm206 = vmand %vm142, %vm174
    %vm207 = vmand %vm143, %vm175
    %vm208 = vmand %vm144, %vm176
    %vm209 = vmand %vm145, %vm177
    %vm210 = vmand %vm146, %vm178
    %vm211 = vmand %vm147, %vm179
    %vm212 = vmand %vm148, %vm180
    %vm213 = vmand %vm149, %vm181
    %vm214 = vmand %vm150, %vm182
    %vm215 = vmand %vm151, %vm183
    %vm216 = vmand %vm152, %vm184
    %vm217 = vmand %vm153, %vm185
    %vm218 = vmand %vm154, %vm186
    %vm219 = vmand %vm155, %vm187
    %vm220 = vmand %vm156, %vm188
    %vm221 = vmand %vm157, %vm189
    %vm222 = vmand %vm158, %vm190
    %vm223 = vmand %vm159, %vm191
    %vm224 = vmand %vm160, %vm192
    %vm225 = vmand %vm161, %vm193
    %v226 = vsel %vm194, 1, 0
    %v227 = vsel %vm195, 1, 0
    %v228 = vsel %vm196, 1, 0
    %v229 = vsel %vm197, 1, 0
    %v230 = vsel %vm198, 1, 0
    %v231 = vsel %vm199, 1, 0
    %v232 = vsel %vm200, 1, 0
    %v233 = vsel %vm201, 1, 0
    %v234 = vsel %vm202, 1, 0
    %v235 = vsel %vm203, 1, 0
    %v236 = vsel %vm204, 1, 0
    %v237 = vsel %vm205, 1, 0
    %v238 = vsel %vm206, 1, 0
    %v239 = vsel %vm207, 1, 0
    %v240 = vsel %vm208, 1, 0
    %v241 = vsel %vm209, 1, 0
    %v242 = vsel %vm210, 1, 0
    %v243 = vsel %vm211, 1, 0
    %v244 = vsel %vm212, 1, 0
    %v245 = vsel %vm213, 1, 0
    %v246 = vsel %vm214, 1, 0
    %v247 = vsel %vm215, 1, 0
    %v248 = vsel %vm216, 1, 0
    %v249 = vsel %vm217, 1, 0
    %v250 = vsel %vm218, 1, 0
    %v251 = vsel %vm219, 1, 0
    %v252 = vsel %vm220, 1, 0
    %v253 = vsel %vm221, 1, 0
    %v254 = vsel %vm222, 1, 0
    %v255 = vsel %vm223, 1, 0
    %v256 = vsel %vm224, 1, 0
    %v257 = vsel %vm225, 1, 0
    %v258 = vcvt.s32.f32 %v226
    %v259 = vcvt.s32.f32 %v227
    %v260 = vcvt.s32.f32 %v228
    %v261 = vcvt.s32.f32 %v229
    %v262 = vcvt.s32.f32 %v230
    %v263 = vcvt.s32.f32 %v231
    %v264 = vcvt.s32.f32 %v232
    %v265 = vcvt.s32.f32 %v233
    %v266 = vcvt.s32.f32 %v234
    %v267 = vcvt.s32.f32 %v235
    %v268 = vcvt.s32.f32 %v236
    %v269 = vcvt.s32.f32 %v237
    %v270 = vcvt.s32.f32 %v238
    %v271 = vcvt.s32.f32 %v239
    %v272 = vcvt.s32.f32 %v240
    %v273 = vcvt.s32.f32 %v241
    %v274 = vcvt.s32.f32 %v242
    %v275 = vcvt.s32.f32 %v243
    %v276 = vcvt.s32.f32 %v244
    %v277 = vcvt.s32.f32 %v245
    %v278 = vcvt.s32.f32 %v246
    %v279 = vcvt.s32.f32 %v247
    %v280 = vcvt.s32.f32 %v248
    %v281 = vcvt.s32.f32 %v249
    %v282 = vcvt.s32.f32 %v250
    %v283 = vcvt.s32.f32 %v251
    %v284 = vcvt.s32.f32 %v252
    %v285 = vcvt.s32.f32 %v253
    %v286 = vcvt.s32.f32 %v254
    %v287 = vcvt.s32.f32 %v255
    %v288 = vcvt.s32.f32 %v256
    %v289 = vcvt.s32.f32 %v257
    %v290 = vadd.s32 %v56, 128
    %v291 = vmul.u32 %v51, 32
    %v292 = vsub.s32 %v56, %v291
    %v293 = vsub.s32 %v290, %v291
    %vm294 = vcmp.ge.s32.totalorder %v292, 0
    %vm295 = vcmp.ge.s32.totalorder %v293, 0
    %vm296 = vcmp.lt.s32.totalorder %v292, 32
    %vm297 = vcmp.lt.s32.totalorder %v293, 32
    %vm298 = vmand %vm294, %vm296
    %vm299 = vmand %vm295, %vm297
    %v300 = vsel %vm298, 1, 0
    %v301 = vsel %vm299, 1, 0
    %v302 = vcvt.s32.f32 %v300
    %v303 = vcvt.s32.f32 %v301
    %305 = vrot.lane.b32.xlu0 %v31, 32
    %v306 = vpop.permute.xlu0 %305
    %308 = vrot.lane.b32.xlu0 %v31, 64
    %v309 = vpop.permute.xlu0 %308
    %311 = vrot.lane.b32.xlu0 %v31, 96
    %v312 = vpop.permute.xlu0 %311
    %vm314 = vcmask 261120
    %v315 = vsel %vm314, %v31, %v306
    %vm316 = vcmask 523264
    %v317 = vsel %vm316, %v315, %v309
    %vm318 = vcmask 785408
    %v319 = vsel %vm318, %v317, %v312
    %321 = vrot.lane.b32.xlu0 %v47, 32
    %v322 = vpop.permute.xlu0 %321
    %324 = vrot.lane.b32.xlu0 %v47, 64
    %v325 = vpop.permute.xlu0 %324
    %327 = vrot.lane.b32.xlu0 %v47, 96
    %v328 = vpop.permute.xlu0 %327
    %v330 = vsel %vm314, %v47, %v322
    %v331 = vsel %vm316, %v330, %v325
    %v332 = vsel %vm318, %v331, %v328
    %v333 = vadd.f32 %v319, %v33
    %v334 = vadd.f32 %v319, %v34
    %v335 = vtanh.pop %v333
    %v336 = vtanh.pop %v334
    %v337 = vlaneseq
    %v338 = vshrl.u32 %v337, 7
    %v339 = vsub.s32 0, %v338
    %v340 = vrot.slane %v332, %v339
    %v341 = vmul.f32 %v335, %v340
    %v342 = vmul.f32 %v336, %v340
    %343 = vmatprep.subr.mxu0 0.0
    %344 = vmatpush1.msra.mxu0 %v258
    %345 = vmatprep.subr.mxu0 0.0
    %346 = vmatpush1.msra.mxu0 %v259
    %347 = vmatprep.subr.mxu0 0.0
    %348 = vmatpush1.msra.mxu0 %v260
    %349 = vmatprep.subr.mxu0 0.0
    %350 = vmatpush1.msra.mxu0 %v261
    %351 = vmatprep.subr.mxu0 0.0
    %352 = vmatpush1.msra.mxu0 %v262
    %353 = vmatprep.subr.mxu0 0.0
    %354 = vmatpush1.msra.mxu0 %v263
    %355 = vmatprep.subr.mxu0 0.0
    %356 = vmatpush1.msra.mxu0 %v264
    %357 = vmatprep.subr.mxu0 0.0
    %358 = vmatpush1.msra.mxu0 %v265
    %359 = vmatprep.subr.mxu0 0.0
    %360 = vmatpush1.msra.mxu0 %v266
    %361 = vmatprep.subr.mxu0 0.0
    %362 = vmatpush1.msra.mxu0 %v267
    %363 = vmatprep.subr.mxu0 0.0
    %364 = vmatpush1.msra.mxu0 %v268
    %365 = vmatprep.subr.mxu0 0.0
    %366 = vmatpush1.msra.mxu0 %v269
    %367 = vmatprep.subr.mxu0 0.0
    %368 = vmatpush1.msra.mxu0 %v270
    %369 = vmatprep.subr.mxu0 0.0
    %370 = vmatpush1.msra.mxu0 %v271
    %371 = vmatprep.subr.mxu0 0.0
    %372 = vmatpush1.msra.mxu0 %v272
    %373 = vmatprep.subr.mxu0 0.0
    %374 = vmatpush1.msra.mxu0 %v273
    %375 = vmatprep.subr.mxu0 0.0
    %376 = vmatpush1.msra.mxu0 %v274
    %377 = vmatprep.subr.mxu0 0.0
    %378 = vmatpush1.msra.mxu0 %v275
    %379 = vmatprep.subr.mxu0 0.0
    %380 = vmatpush1.msra.mxu0 %v276
    %381 = vmatprep.subr.mxu0 0.0
    %382 = vmatpush1.msra.mxu0 %v277
    %383 = vmatprep.subr.mxu0 0.0
    %384 = vmatpush1.msra.mxu0 %v278
    %385 = vmatprep.subr.mxu0 0.0
    %386 = vmatpush1.msra.mxu0 %v279
    %387 = vmatprep.subr.mxu0 0.0
    %388 = vmatpush1.msra.mxu0 %v280
    %389 = vmatprep.subr.mxu0 0.0
    %390 = vmatpush1.msra.mxu0 %v281
    %391 = vmatprep.subr.mxu0 0.0
    %392 = vmatpush1.msra.mxu0 %v282
    %393 = vmatprep.subr.mxu0 0.0
    %394 = vmatpush1.msra.mxu0 %v283
    %395 = vmatprep.subr.mxu0 0.0
    %396 = vmatpush1.msra.mxu0 %v284
    %397 = vmatprep.subr.mxu0 0.0
    %398 = vmatpush1.msra.mxu0 %v285
    %399 = vmatprep.subr.mxu0 0.0
    %400 = vmatpush1.msra.mxu0 %v286
    %401 = vmatprep.subr.mxu0 0.0
    %402 = vmatpush1.msra.mxu0 %v287
    %403 = vmatprep.subr.mxu0 0.0
    %404 = vmatpush1.msra.mxu0 %v288
    %405 = vmatprep.subr.mxu0 0.0
    %406 = vmatpush1.msra.mxu0 %v289
    %407 = vmatprep.mubr.f32.mxu0 %v342
    %408 = vmatmul.mubr.f32.gmra.mrb[0].mxu0 %v341
    %v409 = vpop.f32.mrb[0].mxu0
    %v410 = vadd.f32 0.0, %v409
    %v411 = vpop.f32.mrb[0].mxu0
    %412 = vdwg.mxu0
    %vm413 = vcmask 64512
    %v414 = vsel %vm413, %v410, -inf
    %415 = vmax.xlane.f32.xlu0 %v414
    %v416 = vpop.xlane.xlu0 %415
    %v417 = vsub.f32 %v410, %v416
    %v418 = vmul.f32 %v417, 1.442695
    %v419 = vpow.pop %v418
    %v420 = vsel %vm413, %v419, 0.0
    %421 = vadd.xlane.f32.xlu0 %v420
    %v422 = vpop.xlane.xlu0 %421
    %v423 = vrcp.pop %v422
    %v424 = vmul.f32 %v419, %v423
    %v426 = vsel %vm413, %v424, 0
    %428 = vmatprep.subr.mxu0 %v303
    %429 = vmatpush1.msra.mxu0 %v302
    %430 = vmatprep.subr.mxu0 0.0
    %431 = vmatpush1.msra.mxu0 0.0
    %432 = vmatprep.subr.mxu0 0.0
    %433 = vmatpush1.msra.mxu0 0.0
    %434 = vmatprep.subr.mxu0 0.0
    %435 = vmatpush1.msra.mxu0 0.0
    %436 = vmatprep.subr.mxu0 0.0
    %437 = vmatpush1.msra.mxu0 0.0
    %438 = vmatprep.subr.mxu0 0.0
    %439 = vmatpush1.msra.mxu0 0.0
    %440 = vmatprep.subr.mxu0 0.0
    %441 = vmatpush1.msra.mxu0 0.0
    %442 = vmatprep.subr.mxu0 0.0
    %443 = vmatpush1.msra.mxu0 0.0
    %444 = vmatprep.subr.mxu0 0.0
    %445 = vmatpush1.msra.mxu0 0.0
    %446 = vmatprep.subr.mxu0 0.0
    %447 = vmatpush1.msra.mxu0 0.0
    %448 = vmatprep.subr.mxu0 0.0
    %449 = vmatpush1.msra.mxu0 0.0
    %450 = vmatprep.subr.mxu0 0.0
    %451 = vmatpush1.msra.mxu0 0.0
    %452 = vmatprep.subr.mxu0 0.0
    %453 = vmatpush1.msra.mxu0 0.0
    %454 = vmatprep.subr.mxu0 0.0
    %455 = vmatpush1.msra.mxu0 0.0
    %456 = vmatprep.subr.mxu0 0.0
    %457 = vmatpush1.msra.mxu0 0.0
    %458 = vmatprep.subr.mxu0 0.0
    %459 = vmatpush1.msra.mxu0 0.0
    %460 = vmatprep.subr.mxu0 0.0
    %461 = vmatpush1.msra.mxu0 0.0
    %462 = vmatprep.subr.mxu0 0.0
    %463 = vmatpush1.msra.mxu0 0.0
    %464 = vmatprep.subr.mxu0 0.0
    %465 = vmatpush1.msra.mxu0 0.0
    %466 = vmatprep.subr.mxu0 0.0
    %467 = vmatpush1.msra.mxu0 0.0
    %468 = vmatprep.subr.mxu0 0.0
    %469 = vmatpush1.msra.mxu0 0.0
    %470 = vmatprep.subr.mxu0 0.0
    %471 = vmatpush1.msra.mxu0 0.0
    %472 = vmatprep.subr.mxu0 0.0
    %473 = vmatpush1.msra.mxu0 0.0
    %474 = vmatprep.subr.mxu0 0.0
    %475 = vmatpush1.msra.mxu0 0.0
    %476 = vmatprep.subr.mxu0 0.0
    %477 = vmatpush1.msra.mxu0 0.0
    %478 = vmatprep.subr.mxu0 0.0
    %479 = vmatpush1.msra.mxu0 0.0
    %480 = vmatprep.subr.mxu0 0.0
    %481 = vmatpush1.msra.mxu0 0.0
    %482 = vmatprep.subr.mxu0 0.0
    %483 = vmatpush1.msra.mxu0 0.0
    %484 = vmatprep.subr.mxu0 0.0
    %485 = vmatpush1.msra.mxu0 0.0
    %486 = vmatprep.subr.mxu0 0.0
    %487 = vmatpush1.msra.mxu0 0.0
    %488 = vmatprep.subr.mxu0 0.0
    %489 = vmatpush1.msra.mxu0 0.0
    %490 = vmatprep.subr.mxu0 0.0
    %491 = vmatpush1.msra.mxu0 0.0
    %492 = vmatprep.mubr.f32.mxu0 0.0
    %493 = vmatmul.mubr.f32.gmra.mrb[0].mxu0 %v426
    %v494 = vpop.f32.mrb[0].mxu0
    %v495 = vadd.f32 0.0, %v494
    %v496 = vpop.f32.mrb[0].mxu0
    %v497 = vadd.f32 0.0, %v496
    %498 = vdwg.mxu0
    %v499 = vmul.f32 %v495, %v33
    %v500 = vmul.f32 %v497, %v34
    %501 = vmatprep.subr.mxu0 0.0
    %502 = vmatpush1.msra.mxu0 %v65
    %503 = vmatprep.subr.mxu0 0.0
    %504 = vmatpush1.msra.mxu0 %v66
    %505 = vmatprep.subr.mxu0 0.0
    %506 = vmatpush1.msra.mxu0 %v67
    %507 = vmatprep.subr.mxu0 0.0
    %508 = vmatpush1.msra.mxu0 %v68
    %509 = vmatprep.subr.mxu0 0.0
    %510 = vmatpush1.msra.mxu0 %v65
    %511 = vmatprep.subr.mxu0 0.0
    %512 = vmatpush1.msra.mxu0 %v66
    %513 = vmatprep.subr.mxu0 0.0
    %514 = vmatpush1.msra.mxu0 %v67
    %515 = vmatprep.subr.mxu0 0.0
    %516 = vmatpush1.msra.mxu0 %v68
    %517 = vmatprep.subr.mxu0 0.0
    %518 = vmatpush1.msra.mxu0 %v65
    %519 = vmatprep.subr.mxu0 0.0
    %520 = vmatpush1.msra.mxu0 %v66
    %521 = vmatprep.subr.mxu0 0.0
    %522 = vmatpush1.msra.mxu0 %v67
    %523 = vmatprep.subr.mxu0 0.0
    %524 = vmatpush1.msra.mxu0 %v68
    %525 = vmatprep.subr.mxu0 0.0
    %526 = vmatpush1.msra.mxu0 %v65
    %527 = vmatprep.subr.mxu0 0.0
    %528 = vmatpush1.msra.mxu0 %v66
    %529 = vmatprep.subr.mxu0 0.0
    %530 = vmatpush1.msra.mxu0 %v67
    %531 = vmatprep.subr.mxu0 0.0
    %532 = vmatpush1.msra.mxu0 %v68
    %533 = vmatprep.subr.mxu0 0.0
    %534 = vmatpush1.msra.mxu0 %v65
    %535 = vmatprep.subr.mxu0 0.0
    %536 = vmatpush1.msra.mxu0 %v66
    %537 = vmatprep.subr.mxu0 0.0
    %538 = vmatpush1.msra.mxu0 %v67
    %539 = vmatprep.subr.mxu0 0.0
    %540 = vmatpush1.msra.mxu0 %v68
    %541 = vmatprep.subr.mxu0 0.0
    %542 = vmatpush1.msra.mxu0 %v65
    %543 = vmatprep.subr.mxu0 0.0
    %544 = vmatpush1.msra.mxu0 %v66
    %545 = vmatprep.subr.mxu0 0.0
    %546 = vmatpush1.msra.mxu0 %v67
    %547 = vmatprep.subr.mxu0 0.0
    %548 = vmatpush1.msra.mxu0 %v68
    %549 = vmatprep.subr.mxu0 0.0
    %550 = vmatpush1.msra.mxu0 %v65
    %551 = vmatprep.subr.mxu0 0.0
    %552 = vmatpush1.msra.mxu0 %v66
    %553 = vmatprep.subr.mxu0 0.0
    %554 = vmatpush1.msra.mxu0 %v67
    %555 = vmatprep.subr.mxu0 0.0
    %556 = vmatpush1.msra.mxu0 %v68
    %557 = vmatprep.subr.mxu0 0.0
    %558 = vmatpush1.msra.mxu0 %v65
    %559 = vmatprep.subr.mxu0 0.0
    %560 = vmatpush1.msra.mxu0 %v66
    %561 = vmatprep.subr.mxu0 0.0
    %562 = vmatpush1.msra.mxu0 %v67
    %563 = vmatprep.subr.mxu0 0.0
    %564 = vmatpush1.msra.mxu0 %v68
    %565 = vmatprep.mubr.f32.mxu0 %v500
    %566 = vmatmul.mubr.f32.gmra.mrb[0].mxu0 %v499
    %v567 = vpop.f32.mrb[0].mxu0
    %v568 = vadd.f32 0.0, %v567
    %v569 = vpop.f32.mrb[0].mxu0
    %570 = vdwg.mxu0
    %v571 = vsel %vm314, %v568, %v306
    %v572 = vlaneseq
    %v573 = vshrl.u32 %v572, 7
    %v574 = vsub.s32 0, %v573
    %v575 = vrot.slane %v48, %v574
    %v577 = vsel %vm316, %v571, 0
    %579 = vmatprep.subr.mxu0 0.0
    %580 = vmatpush1.msra.mxu0 %v35
    %581 = vmatprep.subr.mxu0 0.0
    %582 = vmatpush1.msra.mxu0 %v36
    %583 = vmatprep.subr.mxu0 0.0
    %584 = vmatpush1.msra.mxu0 %v37
    %585 = vmatprep.subr.mxu0 0.0
    %586 = vmatpush1.msra.mxu0 %v38
    %587 = vmatprep.subr.mxu0 0.0
    %588 = vmatpush1.msra.mxu0 %v39
    %589 = vmatprep.subr.mxu0 0.0
    %590 = vmatpush1.msra.mxu0 %v40
    %591 = vmatprep.subr.mxu0 0.0
    %592 = vmatpush1.msra.mxu0 %v41
    %593 = vmatprep.subr.mxu0 0.0
    %594 = vmatpush1.msra.mxu0 %v42
    %595 = vmatprep.subr.mxu0 0.0
    %596 = vmatpush1.msra.mxu0 0.0
    %597 = vmatprep.subr.mxu0 0.0
    %598 = vmatpush1.msra.mxu0 0.0
    %599 = vmatprep.subr.mxu0 0.0
    %600 = vmatpush1.msra.mxu0 0.0
    %601 = vmatprep.subr.mxu0 0.0
    %602 = vmatpush1.msra.mxu0 0.0
    %603 = vmatprep.subr.mxu0 0.0
    %604 = vmatpush1.msra.mxu0 0.0
    %605 = vmatprep.subr.mxu0 0.0
    %606 = vmatpush1.msra.mxu0 0.0
    %607 = vmatprep.subr.mxu0 0.0
    %608 = vmatpush1.msra.mxu0 0.0
    %609 = vmatprep.subr.mxu0 0.0
    %610 = vmatpush1.msra.mxu0 0.0
    %611 = vmatprep.subr.mxu0 0.0
    %612 = vmatpush1.msra.mxu0 0.0
    %613 = vmatprep.subr.mxu0 0.0
    %614 = vmatpush1.msra.mxu0 0.0
    %615 = vmatprep.subr.mxu0 0.0
    %616 = vmatpush1.msra.mxu0 0.0
    %617 = vmatprep.subr.mxu0 0.0
    %618 = vmatpush1.msra.mxu0 0.0
    %619 = vmatprep.subr.mxu0 0.0
    %620 = vmatpush1.msra.mxu0 0.0
    %621 = vmatprep.subr.mxu0 0.0
    %622 = vmatpush1.msra.mxu0 0.0
    %623 = vmatprep.subr.mxu0 0.0
    %624 = vmatpush1.msra.mxu0 0.0
    %625 = vmatprep.subr.mxu0 0.0
    %626 = vmatpush1.msra.mxu0 0.0
    %627 = vmatprep.subr.mxu0 0.0
    %628 = vmatpush1.msra.mxu0 0.0
    %629 = vmatprep.subr.mxu0 0.0
    %630 = vmatpush1.msra.mxu0 0.0
    %631 = vmatprep.subr.mxu0 0.0
    %632 = vmatpush1.msra.mxu0 0.0
    %633 = vmatprep.subr.mxu0 0.0
    %634 = vmatpush1.msra.mxu0 0.0
    %635 = vmatprep.subr.mxu0 0.0
    %636 = vmatpush1.msra.mxu0 0.0
    %637 = vmatprep.subr.mxu0 0.0
    %638 = vmatpush1.msra.mxu0 0.0
    %639 = vmatprep.subr.mxu0 0.0
    %640 = vmatpush1.msra.mxu0 0.0
    %641 = vmatprep.subr.mxu0 0.0
    %642 = vmatpush1.msra.mxu0 0.0
    %643 = vmatprep.mubr.f32.mxu0 0.0
    %644 = vmatmul.mubr.f32.gmra.mrb[0].mxu0 %v577
    %v645 = vpop.f32.mrb[0].mxu0
    %v646 = vadd.f32 %v575, %v645
    %v647 = vpop.f32.mrb[0].mxu0
    %648 = vdwg.mxu0
    %v649 = vxor.u32 %v646, 2147483648
    %v650 = vmul.f32 %v649, 1.442695
    %v651 = vpow.pop %v650
    %v652 = vadd.f32 %v651, 1.0
    %v653 = vrcp.pop %v652
    %v654 = vmul.f32 1.0, %v653
    %v655 = vtanh.pop %v646
    %657 = vrot.lane.b32.xlu0 %v32, 32
    %v658 = vpop.permute.xlu0 %657
    %v660 = vmul.f32 %v654, %v658
    %662 = vrot.lane.b32.xlu0 %v655, 64
    %v663 = vpop.permute.xlu0 %662
    %v665 = vmul.f32 %v654, %v663
    %667 = vrot.lane.b32.xlu0 %v665, 32
    %v668 = vpop.permute.xlu0 %667
    %v670 = vadd.f32 %v660, %v668
    %v671 = vtanh.pop %v670
    %673 = vrot.lane.b32.xlu0 %v671, 64
    %v674 = vpop.permute.xlu0 %673
    %v676 = vmul.f32 %v654, %v674
    %v677 = vlaneseq
    %v678 = vshrl.u32 %v677, 7
    %v679 = vsub.s32 0, %v678
    %v680 = vrot.slane %v49, %v679
    %682 = vrot.lane.b32.xlu0 %v676, 32
    %v683 = vpop.permute.xlu0 %682
    %v684 = vsel %vm314, %v683, 0
    %686 = vmatprep.subr.mxu0 0.0
    %687 = vmatpush1.msra.mxu0 %v43
    %688 = vmatprep.subr.mxu0 0.0
    %689 = vmatpush1.msra.mxu0 %v44
    %690 = vmatprep.subr.mxu0 0.0
    %691 = vmatpush1.msra.mxu0 %v45
    %692 = vmatprep.subr.mxu0 0.0
    %693 = vmatpush1.msra.mxu0 %v46
    %694 = vmatprep.subr.mxu0 0.0
    %695 = vmatpush1.msra.mxu0 0.0
    %696 = vmatprep.subr.mxu0 0.0
    %697 = vmatpush1.msra.mxu0 0.0
    %698 = vmatprep.subr.mxu0 0.0
    %699 = vmatpush1.msra.mxu0 0.0
    %700 = vmatprep.subr.mxu0 0.0
    %701 = vmatpush1.msra.mxu0 0.0
    %702 = vmatprep.subr.mxu0 0.0
    %703 = vmatpush1.msra.mxu0 0.0
    %704 = vmatprep.subr.mxu0 0.0
    %705 = vmatpush1.msra.mxu0 0.0
    %706 = vmatprep.subr.mxu0 0.0
    %707 = vmatpush1.msra.mxu0 0.0
    %708 = vmatprep.subr.mxu0 0.0
    %709 = vmatpush1.msra.mxu0 0.0
    %710 = vmatprep.subr.mxu0 0.0
    %711 = vmatpush1.msra.mxu0 0.0
    %712 = vmatprep.subr.mxu0 0.0
    %713 = vmatpush1.msra.mxu0 0.0
    %714 = vmatprep.subr.mxu0 0.0
    %715 = vmatpush1.msra.mxu0 0.0
    %716 = vmatprep.subr.mxu0 0.0
    %717 = vmatpush1.msra.mxu0 0.0
    %718 = vmatprep.subr.mxu0 0.0
    %719 = vmatpush1.msra.mxu0 0.0
    %720 = vmatprep.subr.mxu0 0.0
    %721 = vmatpush1.msra.mxu0 0.0
    %722 = vmatprep.subr.mxu0 0.0
    %723 = vmatpush1.msra.mxu0 0.0
    %724 = vmatprep.subr.mxu0 0.0
    %725 = vmatpush1.msra.mxu0 0.0
    %726 = vmatprep.subr.mxu0 0.0
    %727 = vmatpush1.msra.mxu0 0.0
    %728 = vmatprep.subr.mxu0 0.0
    %729 = vmatpush1.msra.mxu0 0.0
    %730 = vmatprep.subr.mxu0 0.0
    %731 = vmatpush1.msra.mxu0 0.0
    %732 = vmatprep.subr.mxu0 0.0
    %733 = vmatpush1.msra.mxu0 0.0
    %734 = vmatprep.subr.mxu0 0.0
    %735 = vmatpush1.msra.mxu0 0.0
    %736 = vmatprep.subr.mxu0 0.0
    %737 = vmatpush1.msra.mxu0 0.0
    %738 = vmatprep.subr.mxu0 0.0
    %739 = vmatpush1.msra.mxu0 0.0
    %740 = vmatprep.subr.mxu0 0.0
    %741 = vmatpush1.msra.mxu0 0.0
    %742 = vmatprep.subr.mxu0 0.0
    %743 = vmatpush1.msra.mxu0 0.0
    %744 = vmatprep.subr.mxu0 0.0
    %745 = vmatpush1.msra.mxu0 0.0
    %746 = vmatprep.subr.mxu0 0.0
    %747 = vmatpush1.msra.mxu0 0.0
    %748 = vmatprep.subr.mxu0 0.0
    %749 = vmatpush1.msra.mxu0 0.0
    %750 = vmatprep.mubr.f32.mxu0 0.0
    %751 = vmatmul.mubr.f32.gmra.mrb[0].mxu0 %v684
    %v752 = vpop.f32.mrb[0].mxu0
    %v753 = vadd.f32 %v680, %v752
    %v754 = vpop.f32.mrb[0].mxu0
    %755 = vdwg.mxu0
    %vm756 = vcmp.ge.s32.totalorder %v56, 0
    %vm757 = vcmp.lt.s32.totalorder %v56, 5
    %vm758 = vmand %vm756, %vm757
    %v759 = vsel %vm758, 1, 0
    %vm760 = vcmp.eq.s32.totalorder %v759, 1
    %v761 = vsel %vm760, %v753, -inf
    %762 = vmax.xlane.f32.xlu0 %v761
    %v763 = vpop.xlane.xlu0 %762
    %v764 = vsel %vm760, %v763, 0.0
    %vm765 = vcmp.ge.s32.totalorder %v56, 5
    %vm766 = vcmp.lt.s32.totalorder %v56, 9
    %vm767 = vmand %vm765, %vm766
    %v768 = vsel %vm767, 1, 0
    %vm769 = vcmp.eq.s32.totalorder %v768, 1
    %v770 = vsel %vm769, %v753, -inf
    %771 = vmax.xlane.f32.xlu0 %v770
    %v772 = vpop.xlane.xlu0 %771
    %v773 = vsel %vm769, %v772, %v764
    %vm774 = vcmp.ge.s32.totalorder %v56, 9
    %vm775 = vcmp.lt.s32.totalorder %v56, 15
    %vm776 = vmand %vm774, %vm775
    %v777 = vsel %vm776, 1, 0
    %vm778 = vcmp.eq.s32.totalorder %v777, 1
    %v779 = vsel %vm778, %v753, -inf
    %780 = vmax.xlane.f32.xlu0 %v779
    %v781 = vpop.xlane.xlu0 %780
    %v782 = vsel %vm778, %v781, %v773
    %vm783 = vcmp.ge.s32.totalorder %v56, 15
    %vm784 = vcmp.lt.s32.totalorder %v56, 18
    %vm785 = vmand %vm783, %vm784
    %v786 = vsel %vm785, 1, 0
    %vm787 = vcmp.eq.s32.totalorder %v786, 1
    %v788 = vsel %vm787, %v753, -inf
    %789 = vmax.xlane.f32.xlu0 %v788
    %v790 = vpop.xlane.xlu0 %789
    %v791 = vsel %vm787, %v790, %v782
    %vm792 = vcmp.ge.s32.totalorder %v56, 18
    %vm793 = vcmp.lt.s32.totalorder %v56, 20
    %vm794 = vmand %vm792, %vm793
    %v795 = vsel %vm794, 1, 0
    %vm796 = vcmp.eq.s32.totalorder %v795, 1
    %v797 = vsel %vm796, %v753, -inf
    %798 = vmax.xlane.f32.xlu0 %v797
    %v799 = vpop.xlane.xlu0 %798
    %v800 = vsel %vm796, %v799, %v791
    %v801 = vsub.f32 %v753, %v800
    %v802 = vmul.f32 %v801, 1.442695
    %v803 = vpow.pop %v802
    %v804 = vsel %vm760, %v803, 0.0
    %805 = vadd.xlane.f32.xlu0 %v804
    %v806 = vpop.xlane.xlu0 %805
    %v807 = vlog2.pop %v806
    %v808 = vmul.f32 %v807, 0.6931472
    %v809 = vsel %vm760, %v808, 0.0
    %v810 = vsel %vm769, %v803, 0.0
    %811 = vadd.xlane.f32.xlu0 %v810
    %v812 = vpop.xlane.xlu0 %811
    %v813 = vlog2.pop %v812
    %v814 = vmul.f32 %v813, 0.6931472
    %v815 = vsel %vm769, %v814, %v809
    %v816 = vsel %vm778, %v803, 0.0
    %817 = vadd.xlane.f32.xlu0 %v816
    %v818 = vpop.xlane.xlu0 %817
    %v819 = vlog2.pop %v818
    %v820 = vmul.f32 %v819, 0.6931472
    %v821 = vsel %vm778, %v820, %v815
    %v822 = vsel %vm787, %v803, 0.0
    %823 = vadd.xlane.f32.xlu0 %v822
    %v824 = vpop.xlane.xlu0 %823
    %v825 = vlog2.pop %v824
    %v826 = vmul.f32 %v825, 0.6931472
    %v827 = vsel %vm787, %v826, %v821
    %v828 = vsel %vm796, %v803, 0.0
    %829 = vadd.xlane.f32.xlu0 %v828
    %v830 = vpop.xlane.xlu0 %829
    %v831 = vlog2.pop %v830
    %v832 = vmul.f32 %v831, 0.6931472
    %v833 = vsel %vm796, %v832, %v827
    %v834 = vsub.f32 %v801, %v833
    %835 = vrot.lane.b32.xlu0 %v676, 52
    %v836 = vpop.permute.xlu0 %835
    %839 = vrot.lane.b32.xlu0 %v670, 20
    %v840 = vpop.permute.xlu0 %839
    %842 = vrot.lane.b32.xlu0 %v424, 84
    %v843 = vpop.permute.xlu0 %842
    %vm845 = vcmask 162816
    %v846 = vsel %vm845, %v834, %v836
    %vm847 = vcmask 424960
    %v848 = vsel %vm847, %v846, %v840
    %vm849 = vcmask 687104
    %v850 = vsel %vm849, %v848, %v843
    %vm851 = vcmask 752640
    %v852 = vsel %vm851, %v850, 0.0
    %853 = vst [vmem:[%s4] sm:$0xff] %v852
    // Predicated region
    $region22: #{attn_decoder_forward.1} parent=1 // pred_check
      _
    $region23: #{attn_decoder_forward.1} parent=1 // pred_check_branch
      %855 = sbr.rel (0) target = $region25
    $region24: #{attn_decoder_forward.1} parent=1 // pred_region
      _
    $region25: #{attn_decoder_forward.1} parent=1 // pred_fallthru
      _
    // Predicated region
    $region26: #{attn_decoder_forward.1} parent=1 // pred_check
      _
    $region27: #{attn_decoder_forward.1} parent=1 // pred_check_branch
      %857 = sbr.rel (0) target = $region29
    $region28: #{attn_decoder_forward.1} parent=1 // pred_region
      _
    $region29: #{attn_decoder_forward.1} parent=1 // pred_fallthru
      _
    %858 = vsyncpa [#allocation3], 1

</llo_original>
